<compile_context>
chip_gen: v5e
topology: v5e:2x2
jax: 0.10.0
libtpu: 0.0.40
codegen_flags: <defaults>
</compile_context>

<pallas_src>
import functools

import jax
import jax.numpy as jnp
from jax.experimental import pallas as pl
from jax.experimental.pallas import tpu as pltpu

BN_EPS = 1e-5
VMEM_LIMIT_BYTES = 32 * 1024 * 1024     # explicit scoped-VMEM limit (safe on v5e/v6e/v7x)
VMEM_TILE_BUDGET = 20 * 1024 * 1024     # budget used for picking the batch tile


def _round_up(x, m):
    return (x + m - 1) // m * m


def _conv_halves(e, o, w_ref, ntaps, lpool):
    """Even/odd-position conv outputs for one batch.

    e, o : (Cin, Lh) bf16 de-interleaved zero-padded input streams
           (E[m] = xpad[2m], O[m] = xpad[2m+1], Lh = lpool + pad).
    w_ref: (K, Cout, Cin) bf16 per-tap weights.
    Returns ye, yo: (Cout, lpool) f32 with
        ye[:, m] = conv(x)[:, 2m],  yo[:, m] = conv(x)[:, 2m+1].
    """
    ye = None
    yo = None
    for j in range(ntaps):
        wj = w_ref[j]                                         # (Cout, Cin) bf16
        if j % 2 == 0:
            se = e[:, j // 2: j // 2 + lpool]                 # even outputs, tap j
            so = o[:, j // 2: j // 2 + lpool]                 # odd outputs,  tap j
        else:
            se = o[:, (j - 1) // 2: (j - 1) // 2 + lpool]
            so = e[:, (j + 1) // 2: (j + 1) // 2 + lpool]
        pe = jnp.dot(wj, se, preferred_element_type=jnp.float32)
        po = jnp.dot(wj, so, preferred_element_type=jnp.float32)
        ye = pe if ye is None else ye + pe
        yo = po if yo is None else yo + po
    return ye, yo


def _stats_kernel(e_ref, o_ref, w_ref, sum_ref, ssq_ref, *, nb, ntaps, lpool):
    """Per-channel sum / sum-of-squares of the conv output, accumulated along
    the inner ("arbitrary") grid axis into a per-core partial accumulator."""

    @pl.when(pl.program_id(1) == 0)
    def _():
        sum_ref[...] = jnp.zeros_like(sum_ref)
        ssq_ref[...] = jnp.zeros_like(ssq_ref)

    s = jnp.zeros(sum_ref.shape[1:], jnp.float32)             # (Cout, 1)
    q = jnp.zeros(ssq_ref.shape[1:], jnp.float32)
    for i in range(nb):                                       # static, unrolled
        ye, yo = _conv_halves(e_ref[i], o_ref[i], w_ref, ntaps, lpool)
        s = s + jnp.sum(ye, axis=-1, keepdims=True) + jnp.sum(yo, axis=-1, keepdims=True)
        q = q + jnp.sum(ye * ye, axis=-1, keepdims=True) + jnp.sum(yo * yo, axis=-1, keepdims=True)
    sum_ref[...] += s[None]
    ssq_ref[...] += q[None]


def _apply_kernel(e_ref, o_ref, w_ref, scale_ref, shift_ref, out_ref, *, nb, ntaps, lpool):
    """conv (K shifted matmuls) + folded BN affine + maxpool(2) + ReLU."""
    sc = scale_ref[...]                                       # (Cout, 1) f32
    sh = shift_ref[...]
    for i in range(nb):
        ye, yo = _conv_halves(e_ref[i], o_ref[i], w_ref, ntaps, lpool)
        # BN affine before the max (scale may be negative); ReLU after the max
        # (relu(max(a, b)) == max(relu(a), relu(b))).
        out_ref[i] = jnp.maximum(jnp.maximum(ye * sc + sh, yo * sc + sh), 0.0)


def cnn_block(x, conv_w, conv_b, bn_gamma, bn_beta):
    """x: (B, C_in, L) f32 -> (B, C_out, L//2) f32, matching CNNBlock.forward."""
    del conv_b  # per-channel constant is exactly cancelled by training-mode BN mean subtraction
    B, Cin, L = x.shape
    Cout, _, K = conv_w.shape
    assert K % 2 == 1, "padding=(K-1)//2 'same' conv assumes odd kernel size"
    assert L % 2 == 0, "even/odd maxpool pairing requires an even seq_len"
    pad = (K - 1) // 2
    lpool = L // 2
    lh = lpool + pad                                          # even/odd stream length

    # --- glue: pad along L, de-interleave even/odd positions, cast to bf16 ---
    xpad = jnp.pad(x, ((0, 0), (0, 0), (pad, pad))).astype(jnp.bfloat16)
    e = xpad[:, :, 0::2]                                      # (B, Cin, lh)
    o = xpad[:, :, 1::2]                                      # (B, Cin, lh)
    w = jnp.transpose(conv_w, (2, 0, 1)).astype(jnp.bfloat16)  # (K, Cout, Cin)

    # --- tile sizing from an explicit VMEM budget (double-buffered blocks) ---
    in_b = 2 * _round_up(Cin, 16) * _round_up(lh, 128) * 2        # E + O blocks (bf16)
    out_b = _round_up(Cout, 8) * _round_up(lpool, 128) * 4        # f32 output block
    per_batch = 2 * (in_b + out_b)                                # x2 double-buffering
    bt = max(1, min(VMEM_TILE_BUDGET // max(per_batch, 1), B))    # batches per grid step
    if B >= 2:
        bt = max(1, min(bt, B // 2))      # keep >= 2 grid tiles so both v7x TCs get work
    n_tiles = -(-B // bt)
    n_core = 2 if n_tiles >= 2 else 1     # leading "parallel" axis (v7x megacore split)
    n_t = -(-n_tiles // n_core)
    b_pad = n_core * n_t * bt
    if b_pad != B:
        # zero batches give conv output 0 -> contribute 0 to sum/ssq; stats stay exact
        e = jnp.pad(e, ((0, b_pad - B), (0, 0), (0, 0)))
        o = jnp.pad(o, ((0, b_pad - B), (0, 0), (0, 0)))

    grid = (n_core, n_t)
    bmap = lambda c, t: (c * n_t + t, 0, 0)
    e_spec = pl.BlockSpec((bt, Cin, lh), bmap)
    o_spec = pl.BlockSpec((bt, Cin, lh), bmap)
    w_spec = pl.BlockSpec((K, Cout, Cin), lambda c, t: (0, 0, 0))
    stat_spec = pl.BlockSpec((1, Cout, 1), lambda c, t: (c, 0, 0))

    flops = int(2 * Cin * K * Cout * b_pad * L)
    in_bytes = int(b_pad * Cin * lh * 2 * 2 + K * Cout * Cin * 2)

    # --- pass 1: global per-channel sum / sum-of-squares of the conv output ---
    sum_p, ssq_p = pl.pallas_call(
        functools.partial(_stats_kernel, nb=bt, ntaps=K, lpool=lpool),
        out_shape=(jax.ShapeDtypeStruct((n_core, Cout, 1), jnp.float32),
                   jax.ShapeDtypeStruct((n_core, Cout, 1), jnp.float32)),
        grid_spec=pltpu.PrefetchScalarGridSpec(
            num_scalar_prefetch=0, grid=grid,
            in_specs=[e_spec, o_spec, w_spec],
            out_specs=(stat_spec, stat_spec)),
        compiler_params=pltpu.CompilerParams(
            dimension_semantics=("parallel", "arbitrary"),
            vmem_limit_bytes=VMEM_LIMIT_BYTES),
        cost_estimate=pl.CostEstimate(
            flops=flops, transcendentals=0,
            bytes_accessed=in_bytes + 2 * n_core * Cout * 4),
    )(e, o, w)

    # --- fold training-mode BN into one per-channel affine (tiny f32 glue) ---
    n = float(B * L)                                          # real element count
    mean = jnp.sum(sum_p, axis=0) / n                         # (Cout, 1)
    var = jnp.maximum(jnp.sum(ssq_p, axis=0) / n - mean * mean, 0.0)   # clamp: cancellation guard
    scale = bn_gamma.reshape(Cout, 1).astype(jnp.float32) * jax.lax.rsqrt(var + BN_EPS)
    shift = bn_beta.reshape(Cout, 1).astype(jnp.float32) - mean * scale

    # --- pass 2: conv + affine + maxpool(2) + ReLU, written directly as (B, Cout, L//2) ---
    out = pl.pallas_call(
        functools.partial(_apply_kernel, nb=bt, ntaps=K, lpool=lpool),
        out_shape=jax.ShapeDtypeStruct((b_pad, Cout, lpool), jnp.float32),
        grid_spec=pltpu.PrefetchScalarGridSpec(
            num_scalar_prefetch=0, grid=grid,
            in_specs=[e_spec, o_spec, w_spec,
                      pl.BlockSpec((Cout, 1), lambda c, t: (0, 0)),
                      pl.BlockSpec((Cout, 1), lambda c, t: (0, 0))],
            out_specs=pl.BlockSpec((bt, Cout, lpool), bmap)),
        compiler_params=pltpu.CompilerParams(
            dimension_semantics=("parallel", "parallel"),
            vmem_limit_bytes=VMEM_LIMIT_BYTES),
        cost_estimate=pl.CostEstimate(
            flops=flops, transcendentals=0,
            bytes_accessed=in_bytes + 2 * Cout * 4 + b_pad * Cout * lpool * 4),
    )(e, o, w, scale, shift)

    return out[:B]


def reference(x, conv_w, conv_b, bn_gamma, bn_beta):
    """Pure-JAX f32 reference mirroring the PyTorch forward (training-mode BN)."""
    B, Cin, L = x.shape
    Cout, _, K = conv_w.shape
    pad = (K - 1) // 2
    conv = jax.lax.conv_general_dilated(
        x, conv_w, window_strides=(1,), padding=[(pad, pad)],
        dimension_numbers=("NCH", "OIH", "NCH"))
    conv = conv + conv_b[None, :, None]
    mean = conv.mean(axis=(0, 2), keepdims=True)
    var = ((conv - mean) ** 2).mean(axis=(0, 2), keepdims=True)   # biased, like BN
    bn = (conv - mean) * jax.lax.rsqrt(var + BN_EPS)
    bn = bn * bn_gamma[None, :, None] + bn_beta[None, :, None]
    r = jnp.maximum(bn, 0.0)
    Lp = conv.shape[-1]
    return jnp.max(r[:, :, : (Lp // 2) * 2].reshape(B, Cout, Lp // 2, 2), axis=-1)


if __name__ == "__main__":
    # small shapes consistent with the module: batch=2, in_channels=4,
    # out_channels=8, seq_len=16, kernel_size=3
    B, Cin, Cout, L, K = 2, 4, 8, 16, 3

    key = jax.random.PRNGKey(0)
    kx, kw, kb, kg, kbeta = jax.random.split(key, 5)
    x = jax.random.normal(kx, (B, Cin, L), dtype=jnp.float32)
    conv_w = jax.random.normal(kw, (Cout, Cin, K), dtype=jnp.float32) * 0.3
    conv_b = jax.random.normal(kb, (Cout,), dtype=jnp.float32) * 0.1
    bn_gamma = 1.0 + 0.1 * jax.random.normal(kg, (Cout,), dtype=jnp.float32)
    bn_beta = 0.1 * jax.random.normal(kbeta, (Cout,), dtype=jnp.float32)

    out = jax.block_until_ready(cnn_block(x, conv_w, conv_b, bn_gamma, bn_beta))
    ref = reference(x, conv_w, conv_b, bn_gamma, bn_beta)

    assert out.shape == (B, Cout, L // 2), out.shape
    # bf16 matmul inputs (perf review item 1) -> tolerance relaxed vs the f32 reference.
    max_err = float(jnp.max(jnp.abs(out - ref)))
    assert jnp.allclose(out, ref, atol=5e-2, rtol=5e-2), max_err
    print("KERNEL_OK")
</pallas_src>

<mosaic_0001>
module attributes {stable_mosaic.version = 11 : i64} {
  func.func @_stats_kernel(%arg0: i32, %arg1: i32, %arg2: memref<1x4x9xbf16, #tpu.memory_space<vmem>>, %arg3: memref<1x4x9xbf16, #tpu.memory_space<vmem>>, %arg4: memref<3x8x4xbf16, #tpu.memory_space<vmem>>, %arg5: memref<1x8x1xf32, #tpu.memory_space<vmem>>, %arg6: memref<1x8x1xf32, #tpu.memory_space<vmem>>) attributes {dimension_semantics = [#tpu.dimension_semantics<parallel>, #tpu.dimension_semantics<arbitrary>], iteration_bounds = array<i64: 2, 1>, scalar_prefetch = 0 : i64, scratch_operands = 0 : i64, tpu.core_type = #tpu.core_type<tc>, window_params = [{transform_indices = @transform_0, window_bounds = array<i64: 1, 4, 9>}, {transform_indices = @transform_1, window_bounds = array<i64: 1, 4, 9>}, {pipeline_mode = #tpu.pipeline_mode<synchronous>, transform_indices = @transform_2, window_bounds = array<i64: 3, 8, 4>}, {transform_indices = @transform_3, window_bounds = array<i64: 1, 8, 1>}, {transform_indices = @transform_4, window_bounds = array<i64: 1, 8, 1>}]} {
    %c0_i32 = arith.constant 0 : i32
    %0 = arith.cmpi eq, %arg1, %c0_i32 : i32
    %1 = arith.extui %0 : i1 to i32
    %c0_i32_0 = arith.constant 0 : i32
    %2 = arith.cmpi ne, %1, %c0_i32_0 : i32
    scf.if %2 {
      %cst_36 = arith.constant 0.000000e+00 : f32
      %53 = vector.broadcast %cst_36 : f32 to vector<1x8x1xf32>
      %c0_37 = arith.constant 0 : index
      %c0_38 = arith.constant 0 : index
      %c0_39 = arith.constant 0 : index
      %54 = vector.load %arg5[%c0_37, %c0_38, %c0_39] : memref<1x8x1xf32, #tpu.memory_space<vmem>>, vector<1x8x1xf32>
      tpu.vector_store %arg5[%c0_37, %c0_38, %c0_39], %53 {strides = array<i32>} : memref<1x8x1xf32, #tpu.memory_space<vmem>>, vector<1x8x1xf32>,
      %cst_40 = arith.constant 0.000000e+00 : f32
      %55 = vector.broadcast %cst_40 : f32 to vector<1x8x1xf32>
      %c0_41 = arith.constant 0 : index
      %c0_42 = arith.constant 0 : index
      %c0_43 = arith.constant 0 : index
      %56 = vector.load %arg6[%c0_41, %c0_42, %c0_43] : memref<1x8x1xf32, #tpu.memory_space<vmem>>, vector<1x8x1xf32>
      tpu.vector_store %arg6[%c0_41, %c0_42, %c0_43], %55 {strides = array<i32>} : memref<1x8x1xf32, #tpu.memory_space<vmem>>, vector<1x8x1xf32>,
    } else {
    }
    %cst = arith.constant 0.000000e+00 : f32
    %3 = vector.broadcast %cst : f32 to vector<8x1xf32>
    %cst_1 = arith.constant 0.000000e+00 : f32
    %4 = vector.broadcast %cst_1 : f32 to vector<8x1xf32>
    %c0 = arith.constant 0 : index
    %c0_2 = arith.constant 0 : index
    %c0_3 = arith.constant 0 : index
    %5 = vector.load %arg2[%c0, %c0_2, %c0_3] : memref<1x4x9xbf16, #tpu.memory_space<vmem>>, vector<1x4x9xbf16>
    %6 = vector.shape_cast %5 : vector<1x4x9xbf16> to vector<4x9xbf16>
    %c0_4 = arith.constant 0 : index
    %c0_5 = arith.constant 0 : index
    %c0_6 = arith.constant 0 : index
    %7 = vector.load %arg3[%c0_4, %c0_5, %c0_6] : memref<1x4x9xbf16, #tpu.memory_space<vmem>>, vector<1x4x9xbf16>
    %8 = vector.shape_cast %7 : vector<1x4x9xbf16> to vector<4x9xbf16>
    %c0_7 = arith.constant 0 : index
    %c0_8 = arith.constant 0 : index
    %c0_9 = arith.constant 0 : index
    %9 = vector.load %arg4[%c0_7, %c0_8, %c0_9] : memref<3x8x4xbf16, #tpu.memory_space<vmem>>, vector<1x8x4xbf16>
    %10 = vector.shape_cast %9 : vector<1x8x4xbf16> to vector<8x4xbf16>
    %11 = vector.extract_strided_slice %6 {offsets = [0, 0], sizes = [4, 8], strides = [1, 1]} : vector<4x9xbf16> to vector<4x8xbf16>
    %12 = vector.extract_strided_slice %8 {offsets = [0, 0], sizes = [4, 8], strides = [1, 1]} : vector<4x9xbf16> to vector<4x8xbf16>
    %cst_10 = arith.constant dense<0.000000e+00> : vector<8x8xf32>
    %13 = tpu.matmul %10, %11, %cst_10 {dimension_numbers = #tpu.dot_dimension_numbers<[1], [0], [0], [1], [0, 0, 1, 1], [], []>} : vector<8x4xbf16>, vector<4x8xbf16>, vector<8x8xf32> -> vector<8x8xf32>
    %cst_11 = arith.constant dense<0.000000e+00> : vector<8x8xf32>
    %14 = tpu.matmul %10, %12, %cst_11 {dimension_numbers = #tpu.dot_dimension_numbers<[1], [0], [0], [1], [0, 0, 1, 1], [], []>} : vector<8x4xbf16>, vector<4x8xbf16>, vector<8x8xf32> -> vector<8x8xf32>
    %c1 = arith.constant 1 : index
    %c0_12 = arith.constant 0 : index
    %c0_13 = arith.constant 0 : index
    %15 = vector.load %arg4[%c1, %c0_12, %c0_13] : memref<3x8x4xbf16, #tpu.memory_space<vmem>>, vector<1x8x4xbf16>
    %16 = vector.shape_cast %15 : vector<1x8x4xbf16> to vector<8x4xbf16>
    %17 = vector.extract_strided_slice %8 {offsets = [0, 0], sizes = [4, 8], strides = [1, 1]} : vector<4x9xbf16> to vector<4x8xbf16>
    %18 = vector.extract_strided_slice %6 {offsets = [0, 1], sizes = [4, 8], strides = [1, 1]} : vector<4x9xbf16> to vector<4x8xbf16>
    %cst_14 = arith.constant dense<0.000000e+00> : vector<8x8xf32>
    %19 = tpu.matmul %16, %17, %cst_14 {dimension_numbers = #tpu.dot_dimension_numbers<[1], [0], [0], [1], [0, 0, 1, 1], [], []>} : vector<8x4xbf16>, vector<4x8xbf16>, vector<8x8xf32> -> vector<8x8xf32>
    %cst_15 = arith.constant dense<0.000000e+00> : vector<8x8xf32>
    %20 = tpu.matmul %16, %18, %cst_15 {dimension_numbers = #tpu.dot_dimension_numbers<[1], [0], [0], [1], [0, 0, 1, 1], [], []>} : vector<8x4xbf16>, vector<4x8xbf16>, vector<8x8xf32> -> vector<8x8xf32>
    %21 = arith.addf %13, %19 : vector<8x8xf32>
    %22 = arith.addf %14, %20 : vector<8x8xf32>
    %c2 = arith.constant 2 : index
    %c0_16 = arith.constant 0 : index
    %c0_17 = arith.constant 0 : index
    %23 = vector.load %arg4[%c2, %c0_16, %c0_17] : memref<3x8x4xbf16, #tpu.memory_space<vmem>>, vector<1x8x4xbf16>
    %24 = vector.shape_cast %23 : vector<1x8x4xbf16> to vector<8x4xbf16>
    %25 = vector.extract_strided_slice %6 {offsets = [0, 1], sizes = [4, 8], strides = [1, 1]} : vector<4x9xbf16> to vector<4x8xbf16>
    %26 = vector.extract_strided_slice %8 {offsets = [0, 1], sizes = [4, 8], strides = [1, 1]} : vector<4x9xbf16> to vector<4x8xbf16>
    %cst_18 = arith.constant dense<0.000000e+00> : vector<8x8xf32>
    %27 = tpu.matmul %24, %25, %cst_18 {dimension_numbers = #tpu.dot_dimension_numbers<[1], [0], [0], [1], [0, 0, 1, 1], [], []>} : vector<8x4xbf16>, vector<4x8xbf16>, vector<8x8xf32> -> vector<8x8xf32>
    %cst_19 = arith.constant dense<0.000000e+00> : vector<8x8xf32>
    %28 = tpu.matmul %24, %26, %cst_19 {dimension_numbers = #tpu.dot_dimension_numbers<[1], [0], [0], [1], [0, 0, 1, 1], [], []>} : vector<8x4xbf16>, vector<4x8xbf16>, vector<8x8xf32> -> vector<8x8xf32>
    %29 = arith.addf %21, %27 : vector<8x8xf32>
    %30 = arith.addf %22, %28 : vector<8x8xf32>
    %cst_20 = arith.constant dense<0.000000e+00> : vector<8xf32>
    %31 = vector.multi_reduction <add>, %29, %cst_20 [1] : vector<8x8xf32> to vector<8xf32>
    %32 = vector.shape_cast %31 : vector<8xf32> to vector<8x1xf32>
    %33 = arith.addf %3, %32 : vector<8x1xf32>
    %cst_21 = arith.constant dense<0.000000e+00> : vector<8xf32>
    %34 = vector.multi_reduction <add>, %30, %cst_21 [1] : vector<8x8xf32> to vector<8xf32>
    %35 = vector.shape_cast %34 : vector<8xf32> to vector<8x1xf32>
    %36 = arith.addf %33, %35 : vector<8x1xf32>
    %37 = arith.mulf %29, %29 : vector<8x8xf32>
    %cst_22 = arith.constant dense<0.000000e+00> : vector<8xf32>
    %38 = vector.multi_reduction <add>, %37, %cst_22 [1] : vector<8x8xf32> to vector<8xf32>
    %39 = vector.shape_cast %38 : vector<8xf32> to vector<8x1xf32>
    %40 = arith.addf %4, %39 : vector<8x1xf32>
    %41 = arith.mulf %30, %30 : vector<8x8xf32>
    %cst_23 = arith.constant dense<0.000000e+00> : vector<8xf32>
    %42 = vector.multi_reduction <add>, %41, %cst_23 [1] : vector<8x8xf32> to vector<8xf32>
    %43 = vector.shape_cast %42 : vector<8xf32> to vector<8x1xf32>
    %44 = arith.addf %40, %43 : vector<8x1xf32>
    %c0_24 = arith.constant 0 : index
    %c0_25 = arith.constant 0 : index
    %c0_26 = arith.constant 0 : index
    %45 = vector.load %arg5[%c0_24, %c0_25, %c0_26] : memref<1x8x1xf32, #tpu.memory_space<vmem>>, vector<1x8x1xf32>
    %46 = vector.shape_cast %36 : vector<8x1xf32> to vector<1x8x1xf32>
    %47 = arith.addf %45, %46 : vector<1x8x1xf32>
    %c0_27 = arith.constant 0 : index
    %c0_28 = arith.constant 0 : index
    %c0_29 = arith.constant 0 : index
    %48 = vector.load %arg5[%c0_27, %c0_28, %c0_29] : memref<1x8x1xf32, #tpu.memory_space<vmem>>, vector<1x8x1xf32>
    tpu.vector_store %arg5[%c0_27, %c0_28, %c0_29], %47 {strides = array<i32>} : memref<1x8x1xf32, #tpu.memory_space<vmem>>, vector<1x8x1xf32>,
    %c0_30 = arith.constant 0 : index
    %c0_31 = arith.constant 0 : index
    %c0_32 = arith.constant 0 : index
    %49 = vector.load %arg6[%c0_30, %c0_31, %c0_32] : memref<1x8x1xf32, #tpu.memory_space<vmem>>, vector<1x8x1xf32>
    %50 = vector.shape_cast %44 : vector<8x1xf32> to vector<1x8x1xf32>
    %51 = arith.addf %49, %50 : vector<1x8x1xf32>
    %c0_33 = arith.constant 0 : index
    %c0_34 = arith.constant 0 : index
    %c0_35 = arith.constant 0 : index
    %52 = vector.load %arg6[%c0_33, %c0_34, %c0_35] : memref<1x8x1xf32, #tpu.memory_space<vmem>>, vector<1x8x1xf32>
    tpu.vector_store %arg6[%c0_33, %c0_34, %c0_35], %51 {strides = array<i32>} : memref<1x8x1xf32, #tpu.memory_space<vmem>>, vector<1x8x1xf32>,
    return
  }
  func.func @transform_0(%arg0: i32, %arg1: i32) -> (i32, i32, i32) {
    %c1_i32 = arith.constant 1 : i32
    %0 = arith.muli %arg0, %c1_i32 : i32
    %1 = arith.addi %0, %arg1 : i32
    %c0_i32 = arith.constant 0 : i32
    %c0_i32_0 = arith.constant 0 : i32
    %c0_i32_1 = arith.constant 0 : i32
    return %1, %c0_i32, %c0_i32_0 : i32, i32, i32
  }
  func.func @transform_1(%arg0: i32, %arg1: i32) -> (i32, i32, i32) {
    %c1_i32 = arith.constant 1 : i32
    %0 = arith.muli %arg0, %c1_i32 : i32
    %1 = arith.addi %0, %arg1 : i32
    %c0_i32 = arith.constant 0 : i32
    %c0_i32_0 = arith.constant 0 : i32
    %c0_i32_1 = arith.constant 0 : i32
    return %1, %c0_i32, %c0_i32_0 : i32, i32, i32
  }
  func.func @transform_2(%arg0: i32, %arg1: i32) -> (i32, i32, i32) {
    %c0_i32 = arith.constant 0 : i32
    %c0_i32_0 = arith.constant 0 : i32
    %c0_i32_1 = arith.constant 0 : i32
    %c0_i32_2 = arith.constant 0 : i32
    return %c0_i32, %c0_i32_0, %c0_i32_1 : i32, i32, i32
  }
  func.func @transform_3(%arg0: i32, %arg1: i32) -> (i32, i32, i32) {
    %c0_i32 = arith.constant 0 : i32
    %c0_i32_0 = arith.constant 0 : i32
    %c0_i32_1 = arith.constant 0 : i32
    return %arg0, %c0_i32, %c0_i32_0 : i32, i32, i32
  }
  func.func @transform_4(%arg0: i32, %arg1: i32) -> (i32, i32, i32) {
    %c0_i32 = arith.constant 0 : i32
    %c0_i32_0 = arith.constant 0 : i32
    %c0_i32_1 = arith.constant 0 : i32
    return %arg0, %c0_i32, %c0_i32_0 : i32, i32, i32
  }
}

</mosaic_0001>

<llo_original>
// kernel: tpu_custom_call.1
$region0: #{tpu_custom_call.1}
  #allocation0 [shape = 'u32[]', space=smem, size = 0x4, offset = 0x4, fixed_abs, tag = 'smem constant byte address 0x4 - core index']
  #allocation1 [shape = 'u32[72,128]{1,0:T(1,128)}', space=vmem, size = 0x9000, scoped, tag = 'internal scratch']
  %s0 = inlined_call_operand.vmem [shape: bf16[2,4,9], index: 0, kind: input, shape index: {}]
  %s1 = inlined_call_operand.vmem [shape: bf16[2,4,9], index: 1, kind: input, shape index: {}]
  %s2 = inlined_call_operand.vmem [shape: bf16[3,8,4], index: 2, kind: input, shape index: {}]
  %s3 = inlined_call_operand.vmem [shape: f32[2,8,1], index: 3, kind: output, shape index: {0}]
  %s4 = inlined_call_operand.vmem [shape: f32[2,8,1], index: 4, kind: output, shape index: {1}]
  %5 = xla_tuple %s3, %s4
  %s6 = sld [smem:[#allocation0]]
  $region57: #{tpu_custom_call.1} parent=0
    _
  %s8 = ssub.s32 1, %s6
  %s9 = scalar_select 0, %s8, %s6
  loop: start=0, step=1, limit=4
  $region2: #{tpu_custom_call.1} parent=0 // loop_pre_header
    _
  $region3: #{tpu_custom_call.1} parent=0 // loop_header
    %s11 = sphi 0, %s15
    %p12 = scmp.ge.s32.totalorder %s11, 4
    %s18 = sphi 0, %s30
    %s19 = sphi 0, %s26
    %s20 = sphi 0, %s18
    %s21 = sphi 0, %s19
    %s22 = sphi 0, %s20
    %s23 = sphi 0, %s21
    %s35 = sphi 0, %s37
    %s38 = sphi 0, %s35
    %s39 = sphi 0, %s38
    %s55 = sphi 0, %s39
    %s63 = sphi 0, %s65
    %s66 = sphi 0, %s63
    %s67 = sphi 0, %s66
    %s83 = sphi 0, %s67
    %s87 = sphi 0, %s87
    %s89 = sphi 0, %s87
    %s90 = sphi 0, %s89
    %s104 = sphi 0, %s90
    %s110 = sphi 0, %s112
    %s113 = sphi 0, %s110
    %s114 = sphi 0, %s113
    %s130 = sphi 0, %s114
    %s136 = sphi 0, %s138
    %s139 = sphi 0, %s136
    %s140 = sphi 0, %s139
    %s156 = sphi 0, %s140
  $region4: #{tpu_custom_call.1} parent=0 // loop_header_branch
    %14 = sbr.rel (%p12) target = $region8
  $region5: #{tpu_custom_call.1} parent=0 // loop_body
    %s16 = ssub.s32 %s11, 1
    %s17 = ssub.s32 %s11, 2
    %s24 = sadd.s32 1, %s19
    %p25 = scmp.ge.s32.totalorder %s24, 1
    %s26 = scalar_select %p25, 0, %s24
    %s27 = sadd.s32 1, %s18
    %s28 = scalar_select %p25, %s27, %s18
    %p29 = scmp.ge.s32.totalorder %s28, 2
    %s30 = scalar_select %p29, 0, %s28
    %s31 = sadd.s32 %s18, %s19
    %s32 = sadd.s32 %s30, %s26
    %s33 = ssub.s32 %s31, %s32
    %p34 = scmp.eq.s32.totalorder %s33, 0
    %s36 = sadd.s32 %s35, 1
    %s37 = scalar_select %p34, %s35, %s36
    %p40 = pneg %p34
    %p41 = scmp.eq.s32.totalorder %s11, 1
    %p42 = por %p40, %p41
    %p43 = scmp.ne.s32.totalorder %s35, %s38
    %p44 = scmp.eq.s32.totalorder %s11, 0
    %p45 = por %p43, %p44
    %p46 = scmp.ne.s32.totalorder %s35, %s38
    %p47 = scmp.eq.s32.totalorder %s16, 1
    %p48 = por %p46, %p47
    %p49 = scmp.ne.s32.totalorder %s38, %s39
    %p50 = scmp.eq.s32.totalorder %s16, 0
    %p51 = por %p49, %p50
    %p52 = scmp.ne.s32.totalorder %s38, %s39
    %p53 = scmp.eq.s32.totalorder %s17, 1
    %p54 = por %p52, %p53
    %p56 = scmp.ne.s32.totalorder %s39, %s55
    %p57 = scmp.eq.s32.totalorder %s17, 0
    %p58 = por %p56, %p57
    %s59 = sadd.s32 %s18, %s19
    %s60 = sadd.s32 %s30, %s26
    %s61 = ssub.s32 %s59, %s60
    %p62 = scmp.eq.s32.totalorder %s61, 0
    %s64 = sadd.s32 %s63, 1
    %s65 = scalar_select %p62, %s63, %s64
    %p68 = pneg %p62
    %p69 = scmp.eq.s32.totalorder %s11, 1
    %p70 = por %p68, %p69
    %p71 = scmp.ne.s32.totalorder %s63, %s66
    %p72 = scmp.eq.s32.totalorder %s11, 0
    %p73 = por %p71, %p72
    %p74 = scmp.ne.s32.totalorder %s63, %s66
    %p75 = scmp.eq.s32.totalorder %s16, 1
    %p76 = por %p74, %p75
    %p77 = scmp.ne.s32.totalorder %s66, %s67
    %p78 = scmp.eq.s32.totalorder %s16, 0
    %p79 = por %p77, %p78
    %p80 = scmp.ne.s32.totalorder %s66, %s67
    %p81 = scmp.eq.s32.totalorder %s17, 1
    %p82 = por %p80, %p81
    %p84 = scmp.ne.s32.totalorder %s67, %s83
    %p85 = scmp.eq.s32.totalorder %s17, 0
    %p86 = por %p84, %p85
    %s88 = sadd.s32 %s87, 1
    %p91 = scmp.eq.s32.totalorder %s11, 1
    %p92 = scmp.ne.s32.totalorder %s87, %s89
    %p93 = scmp.eq.s32.totalorder %s11, 0
    %p94 = por %p92, %p93
    %p95 = scmp.ne.s32.totalorder %s87, %s89
    %p96 = scmp.eq.s32.totalorder %s16, 1
    %p97 = por %p95, %p96
    %p98 = scmp.ne.s32.totalorder %s89, %s90
    %p99 = scmp.eq.s32.totalorder %s16, 0
    %p100 = por %p98, %p99
    %p101 = scmp.ne.s32.totalorder %s89, %s90
    %p102 = scmp.eq.s32.totalorder %s17, 1
    %p103 = por %p101, %p102
    %p105 = scmp.ne.s32.totalorder %s90, %s104
    %p106 = scmp.eq.s32.totalorder %s17, 0
    %p107 = por %p105, %p106
    %s108 = ssub.s32 %s18, %s30
    %p109 = scmp.eq.s32.totalorder %s108, 0
    %s111 = sadd.s32 %s110, 1
    %s112 = scalar_select %p109, %s110, %s111
    %p115 = pneg %p109
    %p116 = scmp.eq.s32.totalorder %s11, 1
    %p117 = por %p115, %p116
    %p118 = scmp.ne.s32.totalorder %s110, %s113
    %p119 = scmp.eq.s32.totalorder %s11, 0
    %p120 = por %p118, %p119
    %p121 = scmp.ne.s32.totalorder %s110, %s113
    %p122 = scmp.eq.s32.totalorder %s16, 1
    %p123 = por %p121, %p122
    %p124 = scmp.ne.s32.totalorder %s113, %s114
    %p125 = scmp.eq.s32.totalorder %s16, 0
    %p126 = por %p124, %p125
    %p127 = scmp.ne.s32.totalorder %s113, %s114
    %p128 = scmp.eq.s32.totalorder %s17, 1
    %p129 = por %p127, %p128
    %p131 = scmp.ne.s32.totalorder %s114, %s130
    %p132 = scmp.eq.s32.totalorder %s17, 0
    %p133 = por %p131, %p132
    %s134 = ssub.s32 %s18, %s30
    %p135 = scmp.eq.s32.totalorder %s134, 0
    %s137 = sadd.s32 %s136, 1
    %s138 = scalar_select %p135, %s136, %s137
    %p141 = pneg %p135
    %p142 = scmp.eq.s32.totalorder %s11, 1
    %p143 = por %p141, %p142
    %p144 = scmp.ne.s32.totalorder %s136, %s139
    %p145 = scmp.eq.s32.totalorder %s11, 0
    %p146 = por %p144, %p145
    %p147 = scmp.ne.s32.totalorder %s136, %s139
    %p148 = scmp.eq.s32.totalorder %s16, 1
    %p149 = por %p147, %p148
    %p150 = scmp.ne.s32.totalorder %s139, %s140
    %p151 = scmp.eq.s32.totalorder %s16, 0
    %p152 = por %p150, %p151
    %p153 = scmp.ne.s32.totalorder %s139, %s140
    %p154 = scmp.eq.s32.totalorder %s17, 1
    %p155 = por %p153, %p154
    %p157 = scmp.ne.s32.totalorder %s140, %s156
    %p158 = scmp.eq.s32.totalorder %s17, 0
    %p159 = por %p157, %p158
    %p160 = scmp.le.s32.totalorder 1, %s11
    %p161 = scmp.lt.s32.totalorder %s11, 3
    %p162 = pnand %p160, %p161
    %p163 = pneg %p162
    // Predicated region
    $region9: #{tpu_custom_call.1} parent=5 // pred_check
      _
    $region10: #{tpu_custom_call.1} parent=5 // pred_check_branch
      %165 = sbr.rel (%p162) target = $region12
    $region11: #{tpu_custom_call.1} parent=5 // pred_region
      %s166 = ssub.s32 %s11, 1
      // Predicated region
      $region13: #{tpu_custom_call.1} parent=11 // pred_check
        %p167 = pneg %p100
      $region14: #{tpu_custom_call.1} parent=11 // pred_check_branch
        %169 = sbr.rel (%p167) target = $region16
      $region15: #{tpu_custom_call.1} parent=11 // pred_region
        _
      $region16: #{tpu_custom_call.1} parent=11 // pred_fallthru
        _
    $region12: #{tpu_custom_call.1} parent=5 // pred_fallthru
      _
    %p170 = scmp.lt.s32.totalorder %s11, 2
    // Predicated region
    $region17: #{tpu_custom_call.1} parent=5 // pred_check
      %p171 = pneg %p170
    $region18: #{tpu_custom_call.1} parent=5 // pred_check_branch
      %173 = sbr.rel (%p171) target = $region20
    $region19: #{tpu_custom_call.1} parent=5 // pred_region
      // Predicated region
      $region21: #{tpu_custom_call.1} parent=19 // pred_check
        %p174 = pneg %p45
      $region22: #{tpu_custom_call.1} parent=19 // pred_check_branch
        %176 = sbr.rel (%p174) target = $region24
      $region23: #{tpu_custom_call.1} parent=19 // pred_region
        %s177 = sadd.s32 %s18, %s19
        %p178 = scmp.lt.s32.totalorder %s177, 1
        %s179 = scalar_select %p178, %s177, 1
        %s180 = smul.addr %s179, 2
        %s181 = scalar_lea.vmem %s0, %s180
        %s182 = sadd.s32 %s18, %s19
      $region24: #{tpu_custom_call.1} parent=19 // pred_fallthru
        _
      // Predicated region
      $region25: #{tpu_custom_call.1} parent=19 // pred_check
        %p183 = pneg %p73
      $region26: #{tpu_custom_call.1} parent=19 // pred_check_branch
        %185 = sbr.rel (%p183) target = $region28
      $region27: #{tpu_custom_call.1} parent=19 // pred_region
        %s186 = sadd.s32 %s18, %s19
        %p187 = scmp.lt.s32.totalorder %s186, 1
        %s188 = scalar_select %p187, %s186, 1
        %s189 = smul.addr %s188, 2
        %s190 = scalar_lea.vmem %s1, %s189
        %s191 = sadd.s32 %s18, %s19
      $region28: #{tpu_custom_call.1} parent=19 // pred_fallthru
        _
    $region20: #{tpu_custom_call.1} parent=5 // pred_fallthru
      _
    %p192 = scmp.le.s32.totalorder 1, %s11
    %p193 = scmp.lt.s32.totalorder %s11, 3
    %p194 = pnand %p192, %p193
    %p195 = pneg %p194
    // Predicated region
    $region29: #{tpu_custom_call.1} parent=5 // pred_check
      _
    $region30: #{tpu_custom_call.1} parent=5 // pred_check_branch
      %197 = sbr.rel (%p194) target = $region32
    $region31: #{tpu_custom_call.1} parent=5 // pred_region
      %s198 = ssub.s32 %s11, 1
      %s199 = sadd.s32 %s20, %s21
      %p200 = scmp.lt.s32.totalorder %s199, 1
      %s201 = scalar_select %p200, %s199, 1
      %s202 = smul.addr %s201, 2
      %s203 = scalar_lea.vmem %s0, %s202
      %p204 = pneg %p51
      %p205 = pneg %p48
      %s206 = sadd.s32 %s20, %s21
      %p207 = scmp.lt.s32.totalorder %s206, 1
      %s208 = scalar_select %p207, %s206, 1
      %s209 = smul.addr %s208, 2
      %s210 = scalar_lea.vmem %s1, %s209
      %p211 = pneg %p79
      %p212 = pneg %p76
      %p213 = pneg %p100
      %p214 = pneg %p97
      %p215 = pneg %p126
      %p216 = pneg %p123
      %p217 = scmp.lt.s32.totalorder %s20, 1
      %s218 = scalar_select %p217, %s20, 1
      %s219 = smul.addr %s218, 8
      %s220 = scalar_lea.vmem %s3, %s219
      %p221 = pneg %p152
      %p222 = pneg %p149
      %p223 = scmp.lt.s32.totalorder %s20, 1
      %s224 = scalar_select %p223, %s20, 1
      %s225 = smul.addr %s224, 8
      %s226 = scalar_lea.vmem %s4, %s225
      %s227 = sadd.s32 %s20, %s21
      %p228 = scmp.lt.s32.totalorder %s227, 1
      %s229 = scalar_select %p228, %s227, 1
      %s230 = smul.addr %s229, 2
      %s231 = scalar_lea.vmem %s0, %s230
      %s232 = sadd.s32 %s20, %s21
      %s233 = sadd.s32 %s20, %s21
      %p234 = scmp.lt.s32.totalorder %s233, 1
      %s235 = scalar_select %p234, %s233, 1
      %s236 = smul.addr %s235, 2
      %s237 = scalar_lea.vmem %s1, %s236
      %s238 = sadd.s32 %s20, %s21
      %p239 = scmp.lt.s32.totalorder %s20, 1
      %s240 = scalar_select %p239, %s20, 1
      %s241 = smul.addr %s240, 8
      %s242 = scalar_lea.vmem %s3, %s241
      %p243 = scmp.lt.s32.totalorder %s20, 1
      %s244 = scalar_select %p243, %s20, 1
      %s245 = smul.addr %s244, 8
      %s246 = scalar_lea.vmem %s4, %s245
      %p248 = scmp.eq.s32.totalorder %s21, 0
      // Predicated region
      $region33: #{tpu_custom_call.1} parent=31 // pred_check
        %p249 = pneg %p248
      $region34: #{tpu_custom_call.1} parent=31 // pred_check_branch
        %251 = sbr.rel (%p249) target = $region36
      $region35: #{tpu_custom_call.1} parent=31 // pred_region
        %vm252 = vcmask 7168
        %253 = vst.msk [vmem:[%s242] sm:$0xff] %vm252, 0.0
        %254 = vst.msk [vmem:[%s246] sm:$0xff] %vm252, 0.0
      $region36: #{tpu_custom_call.1} parent=31 // pred_fallthru
        _
      %v255 = vld [vmem:[%s231] sm:$0x3]
      %v256 = vld [vmem:[%s237] sm:$0x3]
      %v257 = vld [vmem:[%s2] sm:$0xf]
      %s258 = scalar_lea.vmem %s2, 4
      %v259 = vld [vmem:[%s258] sm:$0xf]
      %vm260 = vcmask 31744
      %v262 = vsel %vm260, %v259, 0
      %vm264 = vcmask 1041408
      %v266 = vsel %vm264, %v256, 0
      %268 = vmatpush.bf16.msra.mxu0 0
      %269 = vmatpush.bf16.msra.mxu0 0
      %270 = vmatpush.bf16.msra.mxu0 0
      %271 = vmatpush.bf16.msra.mxu0 0
      %272 = vmatpush.bf16.msra.mxu0 0
      %273 = vmatpush.bf16.msra.mxu0 0
      %274 = vmatpush.bf16.msra.mxu0 0
      %275 = vmatpush.bf16.msra.mxu0 %v266
      %276 = vmatmul.bf16.gmra.mxu0 %v262
      %v277 = vpop.f32.mrf.mxu0
      %v278 = vadd.f32 0.0, %v277
      %v279 = vpop.f32.mrf.mxu0
      %280 = vdwg.mxu0
      %282 = vst [vmem:[#allocation1] ss:$4 sm:$0xff] %v255
      %v283 = vld.sshfl [vmem:[#allocation1] sm:$0xff pattern:$0x73625140]
      %285 = vrot.lane.b32.xlu0 %v283, 127
      %v286 = vpop.permute.xlu0 %285
      %v288 = vsel %vm264, %v286, 0
      %290 = vmatpush.bf16.msra.mxu0 0
      %291 = vmatpush.bf16.msra.mxu0 0
      %292 = vmatpush.bf16.msra.mxu0 0
      %293 = vmatpush.bf16.msra.mxu0 0
      %294 = vmatpush.bf16.msra.mxu0 0
      %295 = vmatpush.bf16.msra.mxu0 0
      %296 = vmatpush.bf16.msra.mxu0 0
      %297 = vmatpush.bf16.msra.mxu0 %v288
      %298 = vmatmul.bf16.gmra.mxu0 %v262
      %v299 = vpop.f32.mrf.mxu0
      %v300 = vadd.f32 0.0, %v299
      %v301 = vpop.f32.mrf.mxu0
      %302 = vdwg.mxu0
      %v304 = vsel %vm260, %v257, 0
      %v306 = vsel %vm264, %v255, 0
      %308 = vmatpush.bf16.msra.mxu0 0
      %309 = vmatpush.bf16.msra.mxu0 0
      %310 = vmatpush.bf16.msra.mxu0 0
      %311 = vmatpush.bf16.msra.mxu0 0
      %312 = vmatpush.bf16.msra.mxu0 0
      %313 = vmatpush.bf16.msra.mxu0 0
      %314 = vmatpush.bf16.msra.mxu0 0
      %315 = vmatpush.bf16.msra.mxu0 %v306
      %316 = vmatmul.bf16.gmra.mxu0 %v304
      %v317 = vpop.f32.mrf.mxu0
      %v318 = vadd.f32 %v278, %v317
      %v319 = vpop.f32.mrf.mxu0
      %320 = vdwg.mxu0
      %321 = vmatpush.bf16.msra.mxu0 0
      %322 = vmatpush.bf16.msra.mxu0 0
      %323 = vmatpush.bf16.msra.mxu0 0
      %324 = vmatpush.bf16.msra.mxu0 0
      %325 = vmatpush.bf16.msra.mxu0 0
      %326 = vmatpush.bf16.msra.mxu0 0
      %327 = vmatpush.bf16.msra.mxu0 0
      %328 = vmatpush.bf16.msra.mxu0 %v266
      %329 = vmatmul.bf16.gmra.mxu0 %v304
      %v330 = vpop.f32.mrf.mxu0
      %v331 = vadd.f32 %v300, %v330
      %v332 = vpop.f32.mrf.mxu0
      %333 = vdwg.mxu0
      %s334 = scalar_lea.vmem %s2, 8
      %v335 = vld [vmem:[%s334] sm:$0xf]
      %336 = vst [vmem:[#allocation1] ss:$4 sm:$0xff] %v255
      %v337 = vld.sshfl [vmem:[#allocation1] sm:$0xff pattern:$0x73625140]
      %339 = vrot.lane.b32.xlu0 %v337, 127
      %v340 = vpop.permute.xlu0 %339
      %v342 = vsel %vm260, %v335, 0
      %v345 = vsel %vm264, %v340, 0
      %347 = vmatpush.bf16.msra.mxu0 0
      %348 = vmatpush.bf16.msra.mxu0 0
      %349 = vmatpush.bf16.msra.mxu0 0
      %350 = vmatpush.bf16.msra.mxu0 0
      %351 = vmatpush.bf16.msra.mxu0 0
      %352 = vmatpush.bf16.msra.mxu0 0
      %353 = vmatpush.bf16.msra.mxu0 0
      %354 = vmatpush.bf16.msra.mxu0 %v345
      %355 = vmatmul.bf16.gmra.mxu0 %v342
      %v356 = vpop.f32.mrf.mxu0
      %v357 = vadd.f32 0.0, %v356
      %v358 = vpop.f32.mrf.mxu0
      %359 = vdwg.mxu0
      %360 = vst [vmem:[#allocation1] ss:$4 sm:$0xff] %v256
      %v361 = vld.sshfl [vmem:[#allocation1] sm:$0xff pattern:$0x73625140]
      %363 = vrot.lane.b32.xlu0 %v361, 127
      %v364 = vpop.permute.xlu0 %363
      %v366 = vsel %vm264, %v364, 0
      %368 = vmatpush.bf16.msra.mxu0 0
      %369 = vmatpush.bf16.msra.mxu0 0
      %370 = vmatpush.bf16.msra.mxu0 0
      %371 = vmatpush.bf16.msra.mxu0 0
      %372 = vmatpush.bf16.msra.mxu0 0
      %373 = vmatpush.bf16.msra.mxu0 0
      %374 = vmatpush.bf16.msra.mxu0 0
      %375 = vmatpush.bf16.msra.mxu0 %v366
      %376 = vmatmul.bf16.gmra.mxu0 %v342
      %v377 = vpop.f32.mrf.mxu0
      %v378 = vadd.f32 0.0, %v377
      %v379 = vpop.f32.mrf.mxu0
      %380 = vdwg.mxu0
      %v381 = vadd.f32 %v318, %v357
      %v382 = vadd.f32 %v331, %v378
      %vm383 = vcmask 64512
      %v384 = vsel %vm383, %v381, 0.0
      %385 = vadd.xlane.f32.xlu0 %v384
      %v386 = vpop.xlane.xlu0 %385
      %v387 = vadd.f32 %v386, 0.0
      %v388 = vsel %vm383, %v382, 0.0
      %389 = vadd.xlane.f32.xlu0 %v388
      %v390 = vpop.xlane.xlu0 %389
      %v391 = vadd.f32 %v387, %v390
      %v392 = vmul.f32 %v381, %v381
      %v393 = vsel %vm383, %v392, 0.0
      %394 = vadd.xlane.f32.xlu0 %v393
      %v395 = vpop.xlane.xlu0 %394
      %v396 = vadd.f32 %v395, 0.0
      %v397 = vmul.f32 %v382, %v382
      %v398 = vsel %vm383, %v397, 0.0
      %399 = vadd.xlane.f32.xlu0 %v398
      %v400 = vpop.xlane.xlu0 %399
      %v401 = vadd.f32 %v396, %v400
      %v402 = vld [vmem:[%s242] sm:$0xff]
      %v403 = vadd.f32 %v402, %v391
      %vm404 = vcmask 7168
      %405 = vst.msk [vmem:[%s242] sm:$0xff] %vm404, %v403
      %v406 = vld [vmem:[%s246] sm:$0xff]
      %v407 = vadd.f32 %v406, %v401
      %408 = vst.msk [vmem:[%s246] sm:$0xff] %vm404, %v407
      %p409 = scmp.lt.s32.totalorder %s20, 1
      %s410 = scalar_select %p409, %s20, 1
      %s411 = smul.addr %s410, 8
      %s412 = scalar_lea.vmem %s3, %s411
      %p413 = scmp.lt.s32.totalorder %s20, 1
      %s414 = scalar_select %p413, %s20, 1
      %s415 = smul.addr %s414, 8
      %s416 = scalar_lea.vmem %s4, %s415
      // Predicated region
      $region37: #{tpu_custom_call.1} parent=31 // pred_check
        %p417 = pneg %p123
      $region38: #{tpu_custom_call.1} parent=31 // pred_check_branch
        %419 = sbr.rel (%p417) target = $region40
      $region39: #{tpu_custom_call.1} parent=31 // pred_region
        _
      $region40: #{tpu_custom_call.1} parent=31 // pred_fallthru
        _
      // Predicated region
      $region41: #{tpu_custom_call.1} parent=31 // pred_check
        %p420 = pneg %p149
      $region42: #{tpu_custom_call.1} parent=31 // pred_check_branch
        %422 = sbr.rel (%p420) target = $region44
      $region43: #{tpu_custom_call.1} parent=31 // pred_region
        _
      $region44: #{tpu_custom_call.1} parent=31 // pred_fallthru
        _
    $region32: #{tpu_custom_call.1} parent=5 // pred_fallthru
      _
    %p423 = scmp.le.s32.totalorder 2, %s11
    // Predicated region
    $region45: #{tpu_custom_call.1} parent=5 // pred_check
      %p424 = pneg %p423
    $region46: #{tpu_custom_call.1} parent=5 // pred_check_branch
      %426 = sbr.rel (%p424) target = $region48
    $region47: #{tpu_custom_call.1} parent=5 // pred_region
      %s427 = ssub.s32 %s11, 2
      // Predicated region
      $region49: #{tpu_custom_call.1} parent=47 // pred_check
        %p428 = pneg %p129
      $region50: #{tpu_custom_call.1} parent=47 // pred_check_branch
        %430 = sbr.rel (%p428) target = $region52
      $region51: #{tpu_custom_call.1} parent=47 // pred_region
        %p431 = scmp.lt.s32.totalorder %s22, 1
        %s432 = scalar_select %p431, %s22, 1
        %s433 = smul.addr %s432, 8
        %s434 = scalar_lea.vmem %s3, %s433
      $region52: #{tpu_custom_call.1} parent=47 // pred_fallthru
        _
      // Predicated region
      $region53: #{tpu_custom_call.1} parent=47 // pred_check
        %p435 = pneg %p155
      $region54: #{tpu_custom_call.1} parent=47 // pred_check_branch
        %437 = sbr.rel (%p435) target = $region56
      $region55: #{tpu_custom_call.1} parent=47 // pred_region
        %p438 = scmp.lt.s32.totalorder %s22, 1
        %s439 = scalar_select %p438, %s22, 1
        %s440 = smul.addr %s439, 8
        %s441 = scalar_lea.vmem %s4, %s440
      $region56: #{tpu_custom_call.1} parent=47 // pred_fallthru
        _
    $region48: #{tpu_custom_call.1} parent=5 // pred_fallthru
      _
  $region6: #{tpu_custom_call.1} parent=0 // loop_footer
    %s15 = sadd.s32 1, %s11
  $region7: #{tpu_custom_call.1} parent=0 // loop_footer_branch
    %10 = sbr.rel target = $region3
  $region8: #{tpu_custom_call.1} parent=0 // loop_exit
    _

</llo_original>
